<compile_context>
chip_gen: v5e
topology: v5e:2x2
jax: 0.10.0
libtpu: 0.0.40
codegen_flags: <defaults>
</compile_context>

<pallas_src>
import math

import jax
import jax.numpy as jnp
from jax.experimental import pallas as pl
from jax.experimental.pallas import tpu as pltpu

d_model = 64
MAX_LEN = 512  # smaller than 5000 for the demo; semantics identical (we slice pe[:S])

TARGET_BLOCK_BYTES = 4 * 1024 * 1024  # per-block budget (safe double-buffered on v5e/v6e/v7x)


def make_positional_encoding(max_len: int, d: int) -> jnp.ndarray:
    """Deterministic sinusoidal table, identical to the PyTorch __init__."""
    position = jnp.arange(0, max_len, dtype=jnp.float32)[:, None]              # (L, 1)
    div_term = jnp.exp(jnp.arange(0, d, 2, dtype=jnp.float32)
                       * (-math.log(10000.0) / d))                             # (D/2,)
    pe = jnp.zeros((max_len, d), dtype=jnp.float32)
    pe = pe.at[:, 0::2].set(jnp.sin(position * div_term))
    pe = pe.at[:, 1::2].set(jnp.cos(position * div_term))
    return pe


def _pe_add_kernel(x_ref, pe_ref, o_ref):
    # x_ref: (tr, tc) block; pe_ref: (1, tc) -> implicit row broadcast.
    o_ref[...] = x_ref[...] + pe_ref[...]


def _pick_tile(total: int, candidates) -> int:
    """Largest candidate that divides `total`; else the full extent (always legal)."""
    for c in candidates:
        if c <= total and total % c == 0:
            return c
    return total


def positional_encoding_forward(x: jnp.ndarray, pe: jnp.ndarray) -> jnp.ndarray:
    """x: (B, S, D), pe: (max_len, D). Returns x + pe[:S][None] with x's dtype."""
    B, S, D = x.shape
    N = S * D
    dt = x.dtype
    itemsize = jnp.dtype(dt).itemsize

    # Lane-dense flatten: (B, S, D) -> (B, S*D); pe[:S] -> (1, S*D).
    x2 = x.reshape(B, N)
    pe2 = pe[:S, :].astype(dt).reshape(1, N)

    # Column tile: a multiple of 128 that divides N (else full N).
    tc = _pick_tile(N, (8192, 4096, 2048, 1024, 512, 256, 128))
    # Row tile: keep each block around TARGET_BLOCK_BYTES (multiple of 8 rows or full B).
    max_rows = max(1, TARGET_BLOCK_BYTES // (tc * itemsize))
    row_cands = tuple(r for r in (1024, 512, 256, 128, 64, 32, 16, 8) if r <= max_rows)
    tr = _pick_tile(B, row_cands)

    grid = (B // tr, N // tc)

    out2 = pl.pallas_call(
        _pe_add_kernel,
        out_shape=jax.ShapeDtypeStruct((B, N), dt),
        grid=grid,
        in_specs=[
            pl.BlockSpec((tr, tc), lambda i, j: (i, j)),
            # Constant over the row axis -> pe tile stays VMEM-resident across i.
            pl.BlockSpec((1, tc), lambda i, j: (0, j)),
        ],
        out_specs=pl.BlockSpec((tr, tc), lambda i, j: (i, j)),
        input_output_aliases={0: 0},  # out = x + pe: reuse x's buffer
        compiler_params=pltpu.CompilerParams(
            dimension_semantics=("parallel", "parallel"),
            vmem_limit_bytes=48 * 1024 * 1024,
        ),
    )(x2, pe2)

    return out2.reshape(B, S, D)


if __name__ == "__main__":
    pe = make_positional_encoding(MAX_LEN, d_model)

    key = jax.random.PRNGKey(0)
    # Small shape matching the module spec, plus one slightly larger shape that
    # exercises the column-tiled grid and the pe index_map tracking.
    for (B, S) in ((2, 8), (16, 256)):
        key, sub = jax.random.split(key)
        x = jax.random.normal(sub, (B, S, d_model), dtype=jnp.float32)

        ref = x + pe[:S, :][None, :, :]  # plain-JAX reference (computed before the kernel)
        out = jax.block_until_ready(positional_encoding_forward(x, pe))

        assert out.shape == (B, S, d_model)
        assert jnp.allclose(out, ref, atol=1e-6), "mismatch vs reference"

    print("KERNEL_OK")
</pallas_src>

<mosaic_0001>
module attributes {stable_mosaic.version = 11 : i64} {
  func.func @_pe_add_kernel(%arg0: i32, %arg1: i32, %arg2: memref<2x512xf32, #tpu.memory_space<vmem>>, %arg3: memref<1x512xf32, #tpu.memory_space<vmem>>, %arg4: memref<2x512xf32, #tpu.memory_space<vmem>>) attributes {dimension_semantics = [#tpu.dimension_semantics<parallel>, #tpu.dimension_semantics<parallel>], iteration_bounds = array<i64: 1, 1>, scalar_prefetch = 0 : i64, scratch_operands = 0 : i64, tpu.core_type = #tpu.core_type<tc>, window_params = [{transform_indices = @transform_0, window_bounds = array<i64: 2, 512>}, {transform_indices = @transform_1, window_bounds = array<i64: 1, 512>}, {transform_indices = @transform_2, window_bounds = array<i64: 2, 512>}]} {
    %c0 = arith.constant 0 : index
    %c0_0 = arith.constant 0 : index
    %0 = vector.load %arg2[%c0, %c0_0] : memref<2x512xf32, #tpu.memory_space<vmem>>, vector<2x512xf32>
    %c0_1 = arith.constant 0 : index
    %c0_2 = arith.constant 0 : index
    %1 = vector.load %arg3[%c0_1, %c0_2] : memref<1x512xf32, #tpu.memory_space<vmem>>, vector<1x512xf32>
    %2 = vector.broadcast %1 : vector<1x512xf32> to vector<2x512xf32>
    %3 = arith.addf %0, %2 : vector<2x512xf32>
    %c0_3 = arith.constant 0 : index
    %c0_4 = arith.constant 0 : index
    %4 = vector.load %arg4[%c0_3, %c0_4] : memref<2x512xf32, #tpu.memory_space<vmem>>, vector<2x512xf32>
    tpu.vector_store %arg4[%c0_3, %c0_4], %3 {strides = array<i32>} : memref<2x512xf32, #tpu.memory_space<vmem>>, vector<2x512xf32>,
    return
  }
  func.func @transform_0(%arg0: i32, %arg1: i32) -> (i32, i32) {
    %c0_i32 = arith.constant 0 : i32
    return %arg0, %arg1 : i32, i32
  }
  func.func @transform_1(%arg0: i32, %arg1: i32) -> (i32, i32) {
    %c0_i32 = arith.constant 0 : i32
    %c0_i32_0 = arith.constant 0 : i32
    return %c0_i32, %arg1 : i32, i32
  }
  func.func @transform_2(%arg0: i32, %arg1: i32) -> (i32, i32) {
    %c0_i32 = arith.constant 0 : i32
    return %arg0, %arg1 : i32, i32
  }
}

</mosaic_0001>

<llo_original>
// kernel: tpu_custom_call.1
$region0: #{tpu_custom_call.1}
  #allocation0 [shape = 'u32[]', space=smem, size = 0x4, offset = 0x4, fixed_abs, tag = 'smem constant byte address 0x4 - core index']
  #allocation1 [shape = 'u32[72,128]{1,0:T(1,128)}', space=vmem, size = 0x9000, scoped, tag = 'internal scratch']
  %s0 = inlined_call_operand.hbm [shape: f32[2,512], index: 0, kind: input, shape index: {}, may-alias: {0,2}]
  %s1 = inlined_call_operand.vmem [shape: f32[1,512], index: 1, kind: input, shape index: {}]
  %s2 = inlined_call_operand.hbm [shape: f32[2,512], index: 2, kind: output, shape index: {}, may-alias: {0,2}]
  %s3 = sld [smem:[#allocation0]]
  $region22: #{tpu_custom_call.1} parent=0
    _
  %s5 = ssub.s32 1, %s3
  %s6 = scalar_select 0, %s5, %s3
  $region1: #{tpu_custom_call.1} parent=0
    #allocation2 [shape = 'u8[4096]{0}', space=vmem, size = 0x1000, scoped, tag = 'input window, operand 0, single buffered']
    #allocation3 [shape = 's32[1]{0}', space=sflag, size = 0x4, scoped, tag = 'scoped memory for tpu_custom_call.1']
    #allocation4 [shape = 's32[1]{0}', space=sflag, size = 0x4, scoped, tag = 'scoped memory for tpu_custom_call.1']
    #allocation5 [shape = 'u8[4096]{0}', space=vmem, size = 0x1000, scoped, tag = 'output window, operand 0, single buffered']
    %7 = vsyncpa [#allocation3], 0
    %8 = vsyncpa [#allocation4], 0
    // Predicated region
    $region2: #{tpu_custom_call.1} parent=1 // pred_check
      _
    $region3: #{tpu_custom_call.1} parent=1 // pred_check_branch
      %10 = sbr.rel (0) target = $region5
    $region4: #{tpu_custom_call.1} parent=1 // pred_region
      %12 = vsyncadd [#allocation3], 0
      %s14 = sshll.u32 %s0, 4
      %s15 = int_to_ptr.hbm [resolvable:$true] %s14
      %s16 = sshll.u32 [#allocation2], 4
      %s17 = int_to_ptr.vmem [resolvable:$true] %s16
      %19 = dma.hbm_to_vmem [thread:$0]  %s15, 128, %s17, [#allocation3]
    $region5: #{tpu_custom_call.1} parent=1 // pred_fallthru
      _
    // Predicated region
    $region6: #{tpu_custom_call.1} parent=1 // pred_check
      _
    $region7: #{tpu_custom_call.1} parent=1 // pred_check_branch
      %21 = sbr.rel (0) target = $region9
    $region8: #{tpu_custom_call.1} parent=1 // pred_region
      _
    $region9: #{tpu_custom_call.1} parent=1 // pred_fallthru
      _
    // Predicated region
    $region10: #{tpu_custom_call.1} parent=1 // pred_check
      _
    $region11: #{tpu_custom_call.1} parent=1 // pred_check_branch
      %23 = sbr.rel (0) target = $region13
    $region12: #{tpu_custom_call.1} parent=1 // pred_region
      %25 = dma.done [#allocation3], 128
    $region13: #{tpu_custom_call.1} parent=1 // pred_fallthru
      _
    %v26 = vld [vmem:[#allocation2] sm:$0xff]
    %v27 = vld [vmem:[%s1] sm:$0xf]
    %v29 = vperm.slane %v27, 0
    %v30 = vperm.slane %v27, 1
    %v31 = vperm.slane %v27, 2
    %v32 = vperm.slane %v27, 3
    %v33 = vrot.slane %v30, 6
    %v34 = vrot.slane %v31, 4
    %v35 = vrot.slane %v32, 2
    %vm36 = vcmask 1041408
    %v37 = vsel %vm36, %v29, %v33
    %vm38 = vcmask 1045508
    %v39 = vsel %vm38, %v34, %v35
    %vm40 = vcmask 1043456
    %v41 = vsel %vm40, %v37, %v39
    %v43 = vadd.f32 %v26, %v41
    %44 = vst [vmem:[#allocation5] sm:$0xff] %v43
    // Predicated region
    $region14: #{tpu_custom_call.1} parent=1 // pred_check
      _
    $region15: #{tpu_custom_call.1} parent=1 // pred_check_branch
      %46 = sbr.rel (0) target = $region17
    $region16: #{tpu_custom_call.1} parent=1 // pred_region
      %48 = vsyncadd [#allocation4], 0
      %s50 = sshll.u32 [#allocation5], 4
      %s51 = int_to_ptr.vmem [resolvable:$true] %s50
      %s52 = sshll.u32 %s2, 4
      %s53 = int_to_ptr.hbm [resolvable:$true] %s52
      %55 = dma.vmem_to_hbm [thread:$0]  %s51, 128, %s53, [#allocation4]
    $region17: #{tpu_custom_call.1} parent=1 // pred_fallthru
      _
    // Predicated region
    $region18: #{tpu_custom_call.1} parent=1 // pred_check
      _
    $region19: #{tpu_custom_call.1} parent=1 // pred_check_branch
      %57 = sbr.rel (0) target = $region21
    $region20: #{tpu_custom_call.1} parent=1 // pred_region
      %59 = dma.done [#allocation4], 128
    $region21: #{tpu_custom_call.1} parent=1 // pred_fallthru
      _
    %60 = vsyncpa [#allocation3], 1
    %61 = vsyncpa [#allocation4], 1

</llo_original>
